<compile_context>
chip_gen: v7x
topology: tpu7x:2x2x1
jax: 0.10.0
libtpu: 0.0.40
codegen_flags: <defaults>
</compile_context>

<pallas_src>
import functools

import jax
import jax.numpy as jnp
from jax.experimental import pallas as pl
from jax.experimental.pallas import tpu as pltpu

TRIM_H = 128
TRIM_W = 128

_DEFAULT_CHUNK_BYTES = 8 * 1024 * 1024   # ~8 MiB per DMA descriptor
_MAX_CHUNKS = 64                         # cap on unrolled DMA issues
_RING = 4                                # DMA descriptors in flight


def _build_chunks(N, C, plane_bytes, target_bytes):
    """Static list of (n0, n_sz, c0, c_sz) sub-boxes covering (N, C)."""
    per_image = C * plane_bytes
    total = N * per_image
    # Grow the per-DMA target if it would create too many descriptors.
    target = max(target_bytes, -(-total // _MAX_CHUNKS))
    chunks = []
    if per_image <= target:
        # One DMA covers one or more whole images.
        n_sz = max(1, min(N, target // max(per_image, 1)))
        n0 = 0
        while n0 < N:
            sz = min(n_sz, N - n0)
            chunks.append((n0, sz, 0, C))
            n0 += sz
    else:
        # Split the channel dim within each image; last chunk may be ragged.
        c_tile = max(1, min(C, target // max(plane_bytes, 1)))
        for n in range(N):
            c0 = 0
            while c0 < C:
                sz = min(c_tile, C - c0)
                chunks.append((n, 1, c0, sz))
                c0 += sz
    return chunks


def _trim_kernel(x_hbm, o_hbm, sem, *, chunks, out_h, out_w, ring):
    # chunks / out_h / out_w / ring are static Python values (closed over at
    # trace time), so this loop fully unrolls into a chain of DMA issues with
    # a ring of `ring` copies in flight.
    copies = []
    for idx, (n0, n_sz, c0, c_sz) in enumerate(chunks):
        src = x_hbm.at[pl.ds(n0, n_sz), pl.ds(c0, c_sz),
                       pl.ds(0, out_h), pl.ds(0, out_w)]
        dst = o_hbm.at[pl.ds(n0, n_sz), pl.ds(c0, c_sz),
                       pl.ds(0, out_h), pl.ds(0, out_w)]
        cp = pltpu.make_async_copy(src, dst, sem.at[idx % ring])
        if idx >= ring:
            # Free this semaphore slot before reusing it.
            copies[idx - ring].wait()
        cp.start()
        copies.append(cp)
    # Drain the tail of in-flight copies before the kernel exits.
    for cp in copies[max(0, len(copies) - ring):]:
        cp.wait()


def trim(x, *, _target_chunk_bytes=_DEFAULT_CHUNK_BYTES):
    """x: (N, C, H, W) -> x[:, :, :128, :128] (PyTorch `Trim` semantics)."""
    N, C, H, W = x.shape
    out_h = min(H, TRIM_H)   # slicing is a no-op on an axis shorter than 128
    out_w = min(W, TRIM_W)

    # Identity fast path: the slice removes nothing, so skip the kernel and
    # the full HBM read+write it would imply.
    if out_h == H and out_w == W:
        return x

    itemsize = jnp.dtype(x.dtype).itemsize
    plane_bytes = out_h * out_w * itemsize
    chunks = _build_chunks(N, C, plane_bytes, _target_chunk_bytes)
    ring = min(_RING, len(chunks))

    kernel = functools.partial(
        _trim_kernel, chunks=chunks, out_h=out_h, out_w=out_w, ring=ring)

    return pl.pallas_call(
        kernel,
        out_shape=jax.ShapeDtypeStruct((N, C, out_h, out_w), x.dtype),
        in_specs=[pl.BlockSpec(memory_space=pl.ANY)],
        out_specs=pl.BlockSpec(memory_space=pl.ANY),
        scratch_shapes=[pltpu.SemaphoreType.DMA((ring,))],
    )(x)


if __name__ == "__main__":
    # 1) Main path: spatial dims > 128 so the trim actually removes rows/cols.
    x = jax.random.normal(jax.random.PRNGKey(0), (2, 8, 160, 160), jnp.float32)
    y = jax.block_until_ready(trim(x))
    ref = x[:, :, :TRIM_H, :TRIM_W]
    assert y.shape == (2, 8, 128, 128), y.shape
    assert y.dtype == x.dtype
    assert jnp.array_equal(y, ref), "Pallas trim does not match reference slice"

    # 2) Ragged channel chunks + semaphore-ring reuse: force one-plane chunks
    #    so C=5 splits into 5 DMAs (sizes 1,1,1,1,1) through a ring of 4, and
    #    the source rows are strided (W=130 -> 128).
    x2 = jax.random.normal(jax.random.PRNGKey(1), (1, 5, 160, 130), jnp.float32)
    y2 = jax.block_until_ready(
        trim(x2, _target_chunk_bytes=128 * 128 * 4))
    ref2 = x2[:, :, :TRIM_H, :TRIM_W]
    assert y2.shape == ref2.shape, (y2.shape, ref2.shape)
    assert jnp.array_equal(y2, ref2), "Pallas trim mismatch for ragged chunks"

    # 3) H/W <= 128: PyTorch slice is a no-op on those axes -> identity path.
    x3 = jax.random.normal(jax.random.PRNGKey(2), (1, 4, 16, 96), jnp.float32)
    y3 = jax.block_until_ready(trim(x3))
    ref3 = x3[:, :, :TRIM_H, :TRIM_W]
    assert y3.shape == ref3.shape, (y3.shape, ref3.shape)
    assert jnp.array_equal(y3, ref3), "Pallas trim mismatch for identity path"

    print("KERNEL_OK")
</pallas_src>

<mosaic_0001>
module attributes {stable_mosaic.version = 11 : i64} {
  func.func @_trim_kernel(%arg0: memref<2x8x160x160xf32, #tpu.memory_space<any>>, %arg1: memref<2x8x128x128xf32, #tpu.memory_space<any>>, %arg2: memref<1x!tpu.dma_semaphore, #tpu.memory_space<semaphore_mem>>) attributes {dimension_semantics = [], scalar_prefetch = 0 : i64, scratch_operands = 1 : i64, tpu.core_type = #tpu.core_type<tc>} {
    %c0_i32 = arith.constant 0 : i32
    %c0_i32_0 = arith.constant 0 : i32
    %c0_i32_1 = arith.constant 0 : i32
    %c0_i32_2 = arith.constant 0 : i32
    %c0_i32_3 = arith.constant 0 : i32
    %0 = tpu.memref_slice %arg0[%c0_i32_0, %c0_i32_1, %c0_i32_2, %c0_i32_3] : memref<2x8x160x160xf32, #tpu.memory_space<any>> -> memref<2x8x128x128xf32, #tpu.memory_space<any>>
    %c0_i32_4 = arith.constant 0 : i32
    %c0_i32_5 = arith.constant 0 : i32
    %c0_i32_6 = arith.constant 0 : i32
    %c0_i32_7 = arith.constant 0 : i32
    %1 = tpu.memref_slice %arg1[%c0_i32_4, %c0_i32_5, %c0_i32_6, %c0_i32_7] : memref<2x8x128x128xf32, #tpu.memory_space<any>> -> memref<2x8x128x128xf32, #tpu.memory_space<any>>
    %2 = tpu.memref_slice %arg2[%c0_i32] : memref<1x!tpu.dma_semaphore, #tpu.memory_space<semaphore_mem>> -> memref<1x!tpu.dma_semaphore, #tpu.memory_space<semaphore_mem>>
    %3 = tpu.memref_squeeze %2 : memref<1x!tpu.dma_semaphore, #tpu.memory_space<semaphore_mem>> -> memref<!tpu.dma_semaphore, #tpu.memory_space<semaphore_mem>>
    tpu.enqueue_dma source(%0 : memref<2x8x128x128xf32, #tpu.memory_space<any>>) target(%1 : memref<2x8x128x128xf32, #tpu.memory_space<any>>) target_semaphore(%3 : memref<!tpu.dma_semaphore, #tpu.memory_space<semaphore_mem>>)
    %c0_i32_8 = arith.constant 0 : i32
    %c0_i32_9 = arith.constant 0 : i32
    %c0_i32_10 = arith.constant 0 : i32
    %c0_i32_11 = arith.constant 0 : i32
    %c0_i32_12 = arith.constant 0 : i32
    %4 = tpu.memref_slice %arg0[%c0_i32_9, %c0_i32_10, %c0_i32_11, %c0_i32_12] : memref<2x8x160x160xf32, #tpu.memory_space<any>> -> memref<2x8x128x128xf32, #tpu.memory_space<any>>
    %c0_i32_13 = arith.constant 0 : i32
    %c0_i32_14 = arith.constant 0 : i32
    %c0_i32_15 = arith.constant 0 : i32
    %c0_i32_16 = arith.constant 0 : i32
    %5 = tpu.memref_slice %arg1[%c0_i32_13, %c0_i32_14, %c0_i32_15, %c0_i32_16] : memref<2x8x128x128xf32, #tpu.memory_space<any>> -> memref<2x8x128x128xf32, #tpu.memory_space<any>>
    %6 = tpu.memref_slice %arg2[%c0_i32_8] : memref<1x!tpu.dma_semaphore, #tpu.memory_space<semaphore_mem>> -> memref<1x!tpu.dma_semaphore, #tpu.memory_space<semaphore_mem>>
    %7 = tpu.memref_squeeze %6 : memref<1x!tpu.dma_semaphore, #tpu.memory_space<semaphore_mem>> -> memref<!tpu.dma_semaphore, #tpu.memory_space<semaphore_mem>>
    tpu.wait_dma2 semaphore(%7 : memref<!tpu.dma_semaphore, #tpu.memory_space<semaphore_mem>>) src(%4 : memref<2x8x128x128xf32, #tpu.memory_space<any>>) dst(%5 : memref<2x8x128x128xf32, #tpu.memory_space<any>>)
    return
  }
}

</mosaic_0001>

<llo_original>
// kernel: tpu_custom_call.1
$region0: #{tpu_custom_call.1}
  #allocation0 [shape = 'u32[]', space=smem, size = 0x4, offset = 0x4, fixed_abs, tag = 'smem constant byte address 0x4 - core index']
  #allocation1 [shape = 'u32[144,128]{1,0:T(1,128)}', space=vmem, size = 0x12000, scoped, tag = 'internal scratch']
  #allocation2 [shape = 's32[1]{0}', space=sflag, size = 0x4, scoped, tag = 'scratch operand']
  #allocation3 [shape = 's32[]', space=sflag, size = 0x4, offset = 0, fixed_abs, tag = 'sflag constant byte address 0x0 - dummy sync flag']
  %s0 = inlined_call_operand.hbm [shape: f32[2,8,160,160], index: 0, kind: input, shape index: {}]
  %s1 = inlined_call_operand.hbm [shape: f32[2,8,128,128], index: 1, kind: output, shape index: {}]
  %s2 = sld [smem:[#allocation0]]
  $region2: #{tpu_custom_call.1} parent=0
    _
  %s4 = ssub.s32 1, %s2
  %s5 = scalar_select 0, %s4, %s2
  $region1: #{tpu_custom_call.1} parent=0
    #allocation4 [shape = 'u32[6]{0}', space=smem, size = 0x18, scoped, tag = 'DMA stride descriptor']
    %s7 = sshll.u32 1, 14
    %s8 = sxor.u32 4294967295, %s7
    %s11 = sshll.u32 3, 24
    %s12 = sxor.u32 4294967295, %s11
    %s13 = sand.u32 0, %s12
    %s15 = sor.u32 %s13, 0
    %18 = sst [smem:[#allocation4]] 5120
    %s19 = scalar_lea.smem [#allocation4], 1
    %20 = sst [smem:[%s19]] 2048
    %s21 = scalar_lea.smem [#allocation4], 2
    %22 = sst [smem:[%s21]] 16
    %s23 = scalar_lea.smem [#allocation4], 3
    %24 = sst [smem:[%s23]] 256
    %s25 = scalar_lea.smem [#allocation4], 4
    %26 = sst [smem:[%s25]] 128
    %s27 = scalar_lea.smem [#allocation4], 5
    %28 = sst [smem:[%s27]] 8
    %30 = dma.general %s0, 32768, %s1, [#allocation2], [#allocation3], [#allocation4], %s15, 0
    %s31 = smul.u32 8, 2
    %s32 = smul.u32 %s31, 8
    %s33 = smul.u32 %s32, 16
    %s34 = smul.u32 %s33, 1
    %s35 = sshll.u32 %s34, 4
    %36 = dma.done [#allocation2], %s35
  %37 = vsyncmov [#allocation2]
  %s38 = vpop.sfrf %37
  %p39 = scmp.eq.s32.totalorder %s38, 0
  %p40 = pneg %p39
  %42 = shalt.err (%p40)

</llo_original>
